<compile_context>
chip_gen: v5e
topology: v5e:2x2
jax: 0.10.0
libtpu: 0.0.40
codegen_flags: <defaults>
</compile_context>

<pallas_src>
import jax
import jax.numpy as jnp
from jax.experimental import pallas as pl
from jax.experimental.pallas import tpu as pltpu


def _subsampler_kernel(x_ref, a_ref, wb_ref, o_ref):
    # x_ref : (BG, 4*R*Wo)   packed input rows (2R original rows each)
    # a_ref : (4*R*Wo, R*Wo) block-diagonal pooling matrix (0.25 folded in)
    # wb_ref: (BG, 2)        per-row [weight, bias] (per-channel affine)
    # o_ref : (BG, R*Wo)     packed pooled output rows
    pooled = jnp.dot(x_ref[...], a_ref[...], preferred_element_type=jnp.float32)
    wb = wb_ref[...]
    o_ref[...] = (pooled * wb[:, 0:1] + wb[:, 1:2]).astype(o_ref.dtype)


def _choose_pack(ho: int, wo: int) -> int:
    """Largest divisor R of Ho with R*Wo <= max(128, Wo): lane-dense packed
    output rows while keeping the pooling matmul below the f32-MXU/HBM
    balance point on every generation (v5e is the tightest)."""
    cap = max(128, wo)
    best = 1
    for r in range(1, ho + 1):
        if ho % r == 0 and r * wo <= cap:
            best = r
    return best


def _plan_blocks(g: int, kw: int, npk: int, itemsize: int):
    """Rows per block (BG) and a matching vmem_limit_bytes from a
    generation-aware VMEM budget (v7x has only 64 MiB per core)."""
    def rup(a, m):
        return -(-a // m) * m

    cap = 64 << 20                                   # conservative default (v7x per-core)
    try:
        cap = int(pltpu.get_tpu_info().vmem_capacity_bytes)
    except Exception:
        pass
    budget = max(12 << 20, min(cap // 4, 24 << 20))

    kw_pad = rup(kw, 128)
    npk_pad = rup(npk, 128)
    # Double-buffered bytes/row: x block + out block + fused (w,b) block
    # (the (BG,2) operand lane-pads to 128 -> 512 B/row/buffer, budgeted here).
    per_row = 2 * (kw_pad * itemsize + npk_pad * itemsize + 128 * 4)
    a_bytes = 2 * rup(kw, 8) * npk_pad * 4           # resident pooling matrix

    avail = max(budget - a_bytes, 8 * per_row)
    bg = max(8, (avail // per_row) // 8 * 8)

    if g <= 8:
        bg = g
    elif bg >= g:
        bg = g
        if g >= 16:
            # >=2 parallel grid steps so a v7x megacore can use both TensorCores;
            # measured near-zero cost on single-core v5e/v6e.
            bg = max(8, rup(pl.cdiv(g, 2), 8))
    # else: bg is a multiple of 8 < g; the last (partial) block is masked by Pallas.

    vmem_need = bg * per_row + a_bytes
    vmem_limit = int(min(cap, max(vmem_need + (8 << 20), 32 << 20)))
    return bg, vmem_limit


def _pooling_matrix(r: int, wo: int, dtype) -> jnp.ndarray:
    """(4*R*Wo, R*Wo) block-diagonal matrix folding the 2x2 mean, the W lane
    compaction and the R-row output packing into one MXU matmul."""
    kw, npk = 4 * r * wo, r * wo
    ki = jnp.arange(kw)
    oi = jnp.arange(npk)
    in_row, in_col = ki // (2 * wo), ki % (2 * wo)   # position inside the 2R-row group
    out_row, out_col = oi // wo, oi % wo             # position inside the R-row group
    hit = ((in_row[:, None] // 2) == out_row[None, :]) & \
          ((in_col[:, None] // 2) == out_col[None, :])
    return jnp.where(hit, 0.25, 0.0).astype(dtype)


def subsampler(x, weight, bias):
    """x: (N, C, H, W); weight: (C,) or (C,1,1,1); bias: (C,).
    Returns AvgPool2d(2,2)(x) fed through a depthwise 1x1 conv (+bias)."""
    n, c, h, w = x.shape
    ho, wo = h // 2, w // 2
    if n == 0 or c == 0 or ho == 0 or wo == 0:
        return jnp.zeros((n, c, ho, wo), x.dtype)

    r = _choose_pack(ho, wo)
    hg = ho // r
    g = n * c * hg
    kw = 4 * r * wo
    npk = r * wo

    # Free, contiguous reshape: packed row g holds 2R consecutive input rows
    # of one (n, c) image (AvgPool truncates odd trailing rows/cols).
    x2 = x[:, :, : 2 * ho, : 2 * wo].reshape(g, kw)
    if x.dtype == jnp.bfloat16:
        mm_dtype = jnp.bfloat16                      # keep bf16 on the MXU (f32 accum)
    else:
        mm_dtype = jnp.float32
        if x2.dtype != jnp.float32:
            x2 = x2.astype(jnp.float32)

    a = _pooling_matrix(r, wo, mm_dtype)

    # Per-channel affine expanded to per-row [weight, bias]: one fused operand.
    wvec = weight.reshape(-1).astype(jnp.float32)
    bvec = bias.reshape(-1).astype(jnp.float32)
    w_rows = jnp.broadcast_to(wvec[None, :, None], (n, c, hg)).reshape(g)
    b_rows = jnp.broadcast_to(bvec[None, :, None], (n, c, hg)).reshape(g)
    wb = jnp.stack([w_rows, b_rows], axis=-1)        # (G, 2) f32

    bg, vmem_limit = _plan_blocks(g, kw, npk, jnp.dtype(x2.dtype).itemsize)
    grid = (pl.cdiv(g, bg),)

    out2 = pl.pallas_call(
        _subsampler_kernel,
        out_shape=jax.ShapeDtypeStruct((g, npk), x.dtype),
        grid_spec=pltpu.PrefetchScalarGridSpec(
            num_scalar_prefetch=0,
            grid=grid,
            in_specs=[
                pl.BlockSpec((bg, kw), lambda i: (i, 0)),
                pl.BlockSpec((kw, npk), lambda i: (0, 0)),   # resident pooling matrix
                pl.BlockSpec((bg, 2), lambda i: (i, 0)),
            ],
            out_specs=pl.BlockSpec((bg, npk), lambda i: (i, 0)),
        ),
        compiler_params=pltpu.CompilerParams(
            dimension_semantics=("parallel",),
            vmem_limit_bytes=vmem_limit,
        ),
    )(x2, a, wb)

    # Free reshape back: row g packs output rows [R*gh, R*gh + R) of image
    # (n, c), so a plain row-major reshape restores (N, C, Ho, Wo).
    return out2.reshape(n, c, ho, wo)


def subsampler_ref(x, weight, bias):
    """Pure-JAX reference: AvgPool2d(2,2) then depthwise 1x1 conv + bias."""
    n, c, h, w = x.shape
    ho, wo = h // 2, w // 2
    xt = x[:, :, : 2 * ho, : 2 * wo].astype(jnp.float32)
    pooled = xt.reshape(n, c, ho, 2, wo, 2).mean(axis=(3, 5))
    out = (pooled * weight.reshape(-1)[None, :, None, None]
           + bias.reshape(-1)[None, :, None, None])
    return out.astype(x.dtype)


if __name__ == "__main__":
    key = jax.random.PRNGKey(0)
    kx, kwt, kb = jax.random.split(key, 3)

    N, C, H, W = 2, 4, 16, 16
    x = jax.random.normal(kx, (N, C, H, W), dtype=jnp.float32)
    # Depthwise 1x1 conv parameters, shaped as in the PyTorch module.
    weight = jax.random.normal(kwt, (C, 1, 1, 1), dtype=jnp.float32)
    bias = jax.random.normal(kb, (C,), dtype=jnp.float32)

    out = jax.block_until_ready(subsampler(x, weight, bias))
    ref = subsampler_ref(x, weight, bias)

    assert out.shape == (N, C, H // 2, W // 2), out.shape
    assert jnp.allclose(out, ref, atol=1e-5, rtol=1e-5), "mismatch vs reference"

    print("KERNEL_OK")
</pallas_src>

<mosaic_0001>
module attributes {stable_mosaic.version = 11 : i64} {
  func.func @_subsampler_kernel(%arg0: i32, %arg1: memref<8x256xf32, #tpu.memory_space<vmem>>, %arg2: memref<256x64xf32, #tpu.memory_space<vmem>>, %arg3: memref<8x2xf32, #tpu.memory_space<vmem>>, %arg4: memref<8x64xf32, #tpu.memory_space<vmem>>) attributes {dimension_semantics = [#tpu.dimension_semantics<parallel>], iteration_bounds = array<i64: 1>, scalar_prefetch = 0 : i64, scratch_operands = 0 : i64, tpu.core_type = #tpu.core_type<tc>, window_params = [{transform_indices = @transform_0, window_bounds = array<i64: 8, 256>}, {pipeline_mode = #tpu.pipeline_mode<synchronous>, transform_indices = @transform_1, window_bounds = array<i64: 256, 64>}, {transform_indices = @transform_2, window_bounds = array<i64: 8, 2>}, {transform_indices = @transform_3, window_bounds = array<i64: 8, 64>}]} {
    %c0 = arith.constant 0 : index
    %c0_0 = arith.constant 0 : index
    %0 = vector.load %arg1[%c0, %c0_0] : memref<8x256xf32, #tpu.memory_space<vmem>>, vector<8x256xf32>
    %c0_1 = arith.constant 0 : index
    %c0_2 = arith.constant 0 : index
    %1 = vector.load %arg2[%c0_1, %c0_2] : memref<256x64xf32, #tpu.memory_space<vmem>>, vector<256x64xf32>
    %cst = arith.constant dense<0.000000e+00> : vector<8x64xf32>
    %2 = tpu.matmul %0, %1, %cst {dimension_numbers = #tpu.dot_dimension_numbers<[1], [0], [0], [1], [0, 0, 1, 1], [], []>} : vector<8x256xf32>, vector<256x64xf32>, vector<8x64xf32> -> vector<8x64xf32>
    %c0_3 = arith.constant 0 : index
    %c0_4 = arith.constant 0 : index
    %3 = vector.load %arg3[%c0_3, %c0_4] : memref<8x2xf32, #tpu.memory_space<vmem>>, vector<8x2xf32>
    %4 = vector.extract_strided_slice %3 {offsets = [0, 0], sizes = [8, 1], strides = [1, 1]} : vector<8x2xf32> to vector<8x1xf32>
    %5 = vector.broadcast %4 : vector<8x1xf32> to vector<8x64xf32>
    %6 = arith.mulf %2, %5 : vector<8x64xf32>
    %7 = vector.extract_strided_slice %3 {offsets = [0, 1], sizes = [8, 1], strides = [1, 1]} : vector<8x2xf32> to vector<8x1xf32>
    %8 = vector.broadcast %7 : vector<8x1xf32> to vector<8x64xf32>
    %9 = arith.addf %6, %8 : vector<8x64xf32>
    %c0_5 = arith.constant 0 : index
    %c0_6 = arith.constant 0 : index
    %10 = vector.load %arg4[%c0_5, %c0_6] : memref<8x64xf32, #tpu.memory_space<vmem>>, vector<8x64xf32>
    tpu.vector_store %arg4[%c0_5, %c0_6], %9 {strides = array<i32>} : memref<8x64xf32, #tpu.memory_space<vmem>>, vector<8x64xf32>,
    return
  }
  func.func @transform_0(%arg0: i32) -> (i32, i32) {
    %c0_i32 = arith.constant 0 : i32
    %c0_i32_0 = arith.constant 0 : i32
    return %arg0, %c0_i32 : i32, i32
  }
  func.func @transform_1(%arg0: i32) -> (i32, i32) {
    %c0_i32 = arith.constant 0 : i32
    %c0_i32_0 = arith.constant 0 : i32
    %c0_i32_1 = arith.constant 0 : i32
    return %c0_i32, %c0_i32_0 : i32, i32
  }
  func.func @transform_2(%arg0: i32) -> (i32, i32) {
    %c0_i32 = arith.constant 0 : i32
    %c0_i32_0 = arith.constant 0 : i32
    return %arg0, %c0_i32 : i32, i32
  }
  func.func @transform_3(%arg0: i32) -> (i32, i32) {
    %c0_i32 = arith.constant 0 : i32
    %c0_i32_0 = arith.constant 0 : i32
    return %arg0, %c0_i32 : i32, i32
  }
}

</mosaic_0001>

<llo_original>
// kernel: tpu_custom_call.1
$region0: #{tpu_custom_call.1}
  #allocation0 [shape = 'u32[]', space=smem, size = 0x4, offset = 0x4, fixed_abs, tag = 'smem constant byte address 0x4 - core index']
  #allocation1 [shape = 'u32[72,128]{1,0:T(1,128)}', space=vmem, size = 0x9000, scoped, tag = 'internal scratch']
  %s0 = inlined_call_operand.vmem [shape: f32[8,256], index: 0, kind: input, shape index: {}]
  %s1 = inlined_call_operand.vmem [shape: f32[256,64], index: 1, kind: input, shape index: {}]
  %s2 = inlined_call_operand.vmem [shape: f32[8,2], index: 2, kind: input, shape index: {}]
  %s3 = inlined_call_operand.hbm [shape: f32[8,64], index: 3, kind: output, shape index: {}]
  %s4 = sld [smem:[#allocation0]]
  $region22: #{tpu_custom_call.1} parent=0
    _
  %s6 = ssub.s32 1, %s4
  %s7 = scalar_select 0, %s6, %s4
  $region1: #{tpu_custom_call.1} parent=0
    #allocation2 [shape = 'u8[4096]{0}', space=vmem, size = 0x1000, scoped, tag = 'output window, operand 0, single buffered']
    #allocation3 [shape = 's32[1]{0}', space=sflag, size = 0x4, scoped, tag = 'scoped memory for tpu_custom_call.1']
    %8 = vsyncpa [#allocation3], 0
    // Predicated region
    $region2: #{tpu_custom_call.1} parent=1 // pred_check
      _
    $region3: #{tpu_custom_call.1} parent=1 // pred_check_branch
      %10 = sbr.rel (0) target = $region5
    $region4: #{tpu_custom_call.1} parent=1 // pred_region
      _
    $region5: #{tpu_custom_call.1} parent=1 // pred_fallthru
      _
    // Predicated region
    $region6: #{tpu_custom_call.1} parent=1 // pred_check
      _
    $region7: #{tpu_custom_call.1} parent=1 // pred_check_branch
      %12 = sbr.rel (0) target = $region9
    $region8: #{tpu_custom_call.1} parent=1 // pred_region
      _
    $region9: #{tpu_custom_call.1} parent=1 // pred_fallthru
      _
    // Predicated region
    $region10: #{tpu_custom_call.1} parent=1 // pred_check
      _
    $region11: #{tpu_custom_call.1} parent=1 // pred_check_branch
      %14 = sbr.rel (0) target = $region13
    $region12: #{tpu_custom_call.1} parent=1 // pred_region
      _
    $region13: #{tpu_custom_call.1} parent=1 // pred_fallthru
      _
    %v15 = vld [vmem:[%s0] sm:$0xff]
    %v16 = vld [vmem:[%s0 + $0x8] sm:$0xff]
    %v17 = vld [vmem:[%s1] sm:$0xff]
    %v18 = vld [vmem:[%s1 + $0x8] sm:$0xff]
    %v19 = vld [vmem:[%s1 + $0x10] sm:$0xff]
    %v20 = vld [vmem:[%s1 + $0x18] sm:$0xff]
    %v21 = vld [vmem:[%s1 + $0x20] sm:$0xff]
    %v22 = vld [vmem:[%s1 + $0x28] sm:$0xff]
    %v23 = vld [vmem:[%s1 + $0x30] sm:$0xff]
    %v24 = vld [vmem:[%s1 + $0x38] sm:$0xff]
    %v25 = vld [vmem:[%s1 + $0x40] sm:$0xff]
    %v26 = vld [vmem:[%s1 + $0x48] sm:$0xff]
    %v27 = vld [vmem:[%s1 + $0x50] sm:$0xff]
    %v28 = vld [vmem:[%s1 + $0x58] sm:$0xff]
    %v29 = vld [vmem:[%s1 + $0x60] sm:$0xff]
    %v30 = vld [vmem:[%s1 + $0x68] sm:$0xff]
    %v31 = vld [vmem:[%s1 + $0x70] sm:$0xff]
    %v32 = vld [vmem:[%s1 + $0x78] sm:$0xff]
    %v33 = vld [vmem:[%s1 + $0x80] sm:$0xff]
    %v34 = vld [vmem:[%s1 + $0x88] sm:$0xff]
    %v35 = vld [vmem:[%s1 + $0x90] sm:$0xff]
    %v36 = vld [vmem:[%s1 + $0x98] sm:$0xff]
    %v37 = vld [vmem:[%s1 + $0xa0] sm:$0xff]
    %v38 = vld [vmem:[%s1 + $0xa8] sm:$0xff]
    %v39 = vld [vmem:[%s1 + $0xb0] sm:$0xff]
    %v40 = vld [vmem:[%s1 + $0xb8] sm:$0xff]
    %v41 = vld [vmem:[%s1 + $0xc0] sm:$0xff]
    %v42 = vld [vmem:[%s1 + $0xc8] sm:$0xff]
    %v43 = vld [vmem:[%s1 + $0xd0] sm:$0xff]
    %v44 = vld [vmem:[%s1 + $0xd8] sm:$0xff]
    %v45 = vld [vmem:[%s1 + $0xe0] sm:$0xff]
    %v46 = vld [vmem:[%s1 + $0xe8] sm:$0xff]
    %v47 = vld [vmem:[%s1 + $0xf0] sm:$0xff]
    %v48 = vld [vmem:[%s1 + $0xf8] sm:$0xff]
    %49 = vmatpush.msra.mxu0 %v32
    %50 = vmatpush.msra.mxu0 %v31
    %51 = vmatpush.msra.mxu0 %v30
    %52 = vmatpush.msra.mxu0 %v29
    %53 = vmatpush.msra.mxu0 %v28
    %54 = vmatpush.msra.mxu0 %v27
    %55 = vmatpush.msra.mxu0 %v26
    %56 = vmatpush.msra.mxu0 %v25
    %57 = vmatpush.msra.mxu0 %v24
    %58 = vmatpush.msra.mxu0 %v23
    %59 = vmatpush.msra.mxu0 %v22
    %60 = vmatpush.msra.mxu0 %v21
    %61 = vmatpush.msra.mxu0 %v20
    %62 = vmatpush.msra.mxu0 %v19
    %63 = vmatpush.msra.mxu0 %v18
    %64 = vmatpush.msra.mxu0 %v17
    %65 = vmatmul.f32.gmra.mxu0 %v15
    %v66 = vpop.f32.mrf.mxu0
    %v67 = vadd.f32 0.0, %v66
    %68 = vdwg.mxu0
    %69 = vmatpush.msra.mxu0 %v48
    %70 = vmatpush.msra.mxu0 %v47
    %71 = vmatpush.msra.mxu0 %v46
    %72 = vmatpush.msra.mxu0 %v45
    %73 = vmatpush.msra.mxu0 %v44
    %74 = vmatpush.msra.mxu0 %v43
    %75 = vmatpush.msra.mxu0 %v42
    %76 = vmatpush.msra.mxu0 %v41
    %77 = vmatpush.msra.mxu0 %v40
    %78 = vmatpush.msra.mxu0 %v39
    %79 = vmatpush.msra.mxu0 %v38
    %80 = vmatpush.msra.mxu0 %v37
    %81 = vmatpush.msra.mxu0 %v36
    %82 = vmatpush.msra.mxu0 %v35
    %83 = vmatpush.msra.mxu0 %v34
    %84 = vmatpush.msra.mxu0 %v33
    %85 = vmatmul.f32.gmra.mxu0 %v16
    %v86 = vpop.f32.mrf.mxu0
    %v87 = vadd.f32 %v67, %v86
    %88 = vdwg.mxu0
    %v89 = vld [vmem:[%s2] sm:$0xff]
    %91 = vset.pattern.permute.xlu0 0
    %92 = vperm.xlu0 %91, %v89
    %v93 = vpop.permute.xlu0 %92
    %v95 = vmul.f32 %v87, %v93
    %96 = vset.pattern.permute.xlu0 1
    %97 = vperm.xlu0 %96, %v89
    %v98 = vpop.permute.xlu0 %97
    %v100 = vadd.f32 %v95, %v98
    %vm101 = vcmask 523264
    %102 = vst.msk [vmem:[#allocation2] sm:$0xff] %vm101, %v100
    // Predicated region
    $region14: #{tpu_custom_call.1} parent=1 // pred_check
      _
    $region15: #{tpu_custom_call.1} parent=1 // pred_check_branch
      %104 = sbr.rel (0) target = $region17
    $region16: #{tpu_custom_call.1} parent=1 // pred_region
      %106 = vsyncadd [#allocation3], 0
      %s108 = sshll.u32 [#allocation2], 4
      %s109 = int_to_ptr.vmem [resolvable:$true] %s108
      %s110 = sshll.u32 %s3, 4
      %s111 = int_to_ptr.hbm [resolvable:$true] %s110
      %113 = dma.vmem_to_hbm [thread:$0]  %s109, 128, %s111, [#allocation3]
    $region17: #{tpu_custom_call.1} parent=1 // pred_fallthru
      _
    // Predicated region
    $region18: #{tpu_custom_call.1} parent=1 // pred_check
      _
    $region19: #{tpu_custom_call.1} parent=1 // pred_check_branch
      %115 = sbr.rel (0) target = $region21
    $region20: #{tpu_custom_call.1} parent=1 // pred_region
      %117 = dma.done [#allocation3], 128
    $region21: #{tpu_custom_call.1} parent=1 // pred_fallthru
      _
    %118 = vsyncpa [#allocation3], 1

</llo_original>
